<compile_context>
chip_gen: v5e
topology: v5e:2x2
jax: 0.10.0
libtpu: 0.0.40
codegen_flags: <defaults>
</compile_context>

<pallas_src>
import functools

import jax
import jax.numpy as jnp
from jax.experimental import pallas as pl
from jax.experimental.pallas import tpu as pltpu

LANES = 128


def dqn_kernel(x_ref, w1_ref, b1_ref, w2_ref, b2_ref, w3_ref, b3_ref, o_ref):
    # One (TM, S) batch tile per grid step; weights/biases are VMEM-resident.
    x = x_ref[...]          # bf16 (TM, S)
    b1 = b1_ref[...]        # f32  (1, H1)   H1 = 128
    b2 = b2_ref[...]        # f32  (1, H2p)  H2p = 128 (lane-padded from 64)
    b3 = b3_ref[...]        # f32  (1, N3)   N3 = 128 (lane-padded from action_dims)

    # fc1 + ReLU  (bf16 operands, f32 accumulation on the MXU)
    h1 = jnp.dot(x, w1_ref[...], preferred_element_type=jnp.float32) + b1
    h1 = jnp.maximum(h1, 0.0).astype(jnp.bfloat16)

    # fc2 + ReLU  (padded columns are zero -> ReLU(0) = 0, exact)
    h2 = jnp.dot(h1, w2_ref[...], preferred_element_type=jnp.float32) + b2
    h2 = jnp.maximum(h2, 0.0).astype(jnp.bfloat16)

    # fc3 (no activation) -> lane-dense 128-wide output slab
    o_ref[...] = (
        jnp.dot(h2, w3_ref[...], preferred_element_type=jnp.float32) + b3
    ).astype(o_ref.dtype)


def _round_up(n, m):
    return ((n + m - 1) // m) * m


@functools.partial(jax.jit, static_argnames=("tm",))
def dqn_forward(x, params, *, tm=512):
    """y = fc3(relu(fc2(relu(fc1(x))))). Weights stored (in, out) vs. PyTorch."""
    w1, b1, w2, b2, w3, b3 = params
    B, state_dims = x.shape
    h1_dim, h2_dim = w1.shape[1], w2.shape[1]
    action_dims = w3.shape[1]

    # bf16 operands for the MXU; biases stay f32 (added to f32 accumulators).
    xb = x.astype(jnp.bfloat16)
    w1b = w1.astype(jnp.bfloat16)
    w2b = w2.astype(jnp.bfloat16)
    w3b = w3.astype(jnp.bfloat16)

    # Lane-dense intermediates/output: pad every feature dim to a multiple of 128.
    h1p = _round_up(h1_dim, LANES)                      # 128 -> 128
    h2p = _round_up(h2_dim, LANES)                      # 64  -> 128
    n3 = _round_up(action_dims, LANES)                  # action_dims -> 128

    w1pd = jnp.zeros((state_dims, h1p), jnp.bfloat16).at[:, :h1_dim].set(w1b)
    b1pd = jnp.zeros((1, h1p), jnp.float32).at[:, :h1_dim].set(b1)
    w2pd = jnp.zeros((h1p, h2p), jnp.bfloat16).at[:h1_dim, :h2_dim].set(w2b)
    b2pd = jnp.zeros((1, h2p), jnp.float32).at[:, :h2_dim].set(b2)
    w3pd = jnp.zeros((h2p, n3), jnp.bfloat16).at[:h2_dim, :action_dims].set(w3b)
    b3pd = jnp.zeros((1, n3), jnp.float32).at[:, :action_dims].set(b3)

    # Pad batch to full sublane groups (>=8) and to a multiple of the tile.
    b_pad = max(8, _round_up(B, 8))
    tm_eff = min(tm, b_pad)
    b_pad = _round_up(b_pad, tm_eff)
    if b_pad != B:
        xb = jnp.zeros((b_pad, state_dims), jnp.bfloat16).at[:B, :].set(xb)

    grid = (b_pad // tm_eff,)

    # Advisory cost hint so XLA can overlap this small custom call.
    flops = 2 * b_pad * (state_dims * h1p + h1p * h2p + h2p * n3)
    bytes_accessed = (
        b_pad * state_dims * 2                        # x (bf16)
        + state_dims * h1p * 2 + h1p * 4              # w1, b1
        + h1p * h2p * 2 + h2p * 4                     # w2, b2
        + h2p * n3 * 2 + n3 * 4                       # w3, b3
        + b_pad * n3 * 4                              # out (f32)
    )

    out = pl.pallas_call(
        dqn_kernel,
        out_shape=jax.ShapeDtypeStruct((b_pad, n3), jnp.float32),
        grid=grid,
        in_specs=[
            pl.BlockSpec((tm_eff, state_dims), lambda i: (i, 0)),  # x tile
            pl.BlockSpec((state_dims, h1p), lambda i: (0, 0)),     # w1 (resident)
            pl.BlockSpec((1, h1p), lambda i: (0, 0)),              # b1
            pl.BlockSpec((h1p, h2p), lambda i: (0, 0)),            # w2
            pl.BlockSpec((1, h2p), lambda i: (0, 0)),              # b2
            pl.BlockSpec((h2p, n3), lambda i: (0, 0)),             # w3
            pl.BlockSpec((1, n3), lambda i: (0, 0)),               # b3
        ],
        out_specs=pl.BlockSpec((tm_eff, n3), lambda i: (i, 0)),
        compiler_params=pltpu.CompilerParams(
            dimension_semantics=("parallel",),  # megacore sharding on v7x
        ),
        cost_estimate=pl.CostEstimate(
            flops=flops, transcendentals=0, bytes_accessed=bytes_accessed
        ),
    )(xb, w1pd, b1pd, w2pd, b2pd, w3pd, b3pd)

    # Strip batch / lane padding.
    return out[:B, :action_dims]


def init_params(key, state_dims, action_dims):
    """Deterministic PyTorch-style uniform init; weights stored (in, out)."""
    def linear(key, fan_in, fan_out):
        kw, kb = jax.random.split(key)
        bound = 1.0 / jnp.sqrt(fan_in)
        w = jax.random.uniform(kw, (fan_in, fan_out), jnp.float32, -bound, bound)
        b = jax.random.uniform(kb, (1, fan_out), jnp.float32, -bound, bound)
        return w, b

    k1, k2, k3 = jax.random.split(key, 3)
    w1, b1 = linear(k1, state_dims, 128)
    w2, b2 = linear(k2, 128, 64)
    w3, b3 = linear(k3, 64, action_dims)
    return (w1, b1, w2, b2, w3, b3)


def ref_forward(x, params):
    """Pure-JAX reference with the same bf16-operand / f32-accumulate semantics."""
    w1, b1, w2, b2, w3, b3 = params
    xb = x.astype(jnp.bfloat16)
    h1 = jnp.dot(xb, w1.astype(jnp.bfloat16), preferred_element_type=jnp.float32) + b1
    h1 = jnp.maximum(h1, 0.0).astype(jnp.bfloat16)
    h2 = jnp.dot(h1, w2.astype(jnp.bfloat16), preferred_element_type=jnp.float32) + b2
    h2 = jnp.maximum(h2, 0.0).astype(jnp.bfloat16)
    return jnp.dot(h2, w3.astype(jnp.bfloat16), preferred_element_type=jnp.float32) + b3


if __name__ == "__main__":
    key = jax.random.PRNGKey(0)
    state_dims, action_dims, batch = 16, 8, 4

    k_params, k_x, k_x2 = jax.random.split(key, 3)
    params = init_params(k_params, state_dims, action_dims)

    # Small inference-style batch (padded internally to a full sublane group).
    x = jax.random.normal(k_x, (batch, state_dims), jnp.float32)
    out = jax.block_until_ready(dqn_forward(x, params))
    ref = ref_forward(x, params)
    assert out.shape == (batch, action_dims)
    assert jnp.allclose(out, ref, atol=1e-2, rtol=1e-2)

    # Larger ragged batch to exercise the batch grid, pipelining and padding.
    big_batch = 1000
    x2 = jax.random.normal(k_x2, (big_batch, state_dims), jnp.float32)
    out2 = jax.block_until_ready(dqn_forward(x2, params, tm=512))
    ref2 = ref_forward(x2, params)
    assert out2.shape == (big_batch, action_dims)
    assert jnp.allclose(out2, ref2, atol=1e-2, rtol=1e-2)

    print("KERNEL_OK")
</pallas_src>

<mosaic_0001>
module attributes {stable_mosaic.version = 11 : i64} {
  func.func @dqn_kernel(%arg0: i32, %arg1: memref<8x16xbf16, #tpu.memory_space<vmem>>, %arg2: memref<16x128xbf16, #tpu.memory_space<vmem>>, %arg3: memref<1x128xf32, #tpu.memory_space<vmem>>, %arg4: memref<128x128xbf16, #tpu.memory_space<vmem>>, %arg5: memref<1x128xf32, #tpu.memory_space<vmem>>, %arg6: memref<128x128xbf16, #tpu.memory_space<vmem>>, %arg7: memref<1x128xf32, #tpu.memory_space<vmem>>, %arg8: memref<8x128xf32, #tpu.memory_space<vmem>>) attributes {dimension_semantics = [#tpu.dimension_semantics<parallel>], iteration_bounds = array<i64: 1>, scalar_prefetch = 0 : i64, scratch_operands = 0 : i64, tpu.core_type = #tpu.core_type<tc>, window_params = [{transform_indices = @transform_0, window_bounds = array<i64: 8, 16>}, {pipeline_mode = #tpu.pipeline_mode<synchronous>, transform_indices = @transform_1, window_bounds = array<i64: 16, 128>}, {pipeline_mode = #tpu.pipeline_mode<synchronous>, transform_indices = @transform_2, window_bounds = array<i64: 1, 128>}, {pipeline_mode = #tpu.pipeline_mode<synchronous>, transform_indices = @transform_3, window_bounds = array<i64: 128, 128>}, {pipeline_mode = #tpu.pipeline_mode<synchronous>, transform_indices = @transform_4, window_bounds = array<i64: 1, 128>}, {pipeline_mode = #tpu.pipeline_mode<synchronous>, transform_indices = @transform_5, window_bounds = array<i64: 128, 128>}, {pipeline_mode = #tpu.pipeline_mode<synchronous>, transform_indices = @transform_6, window_bounds = array<i64: 1, 128>}, {transform_indices = @transform_7, window_bounds = array<i64: 8, 128>}]} {
    %c0 = arith.constant 0 : index
    %c0_0 = arith.constant 0 : index
    %0 = vector.load %arg1[%c0, %c0_0] : memref<8x16xbf16, #tpu.memory_space<vmem>>, vector<8x16xbf16>
    %c0_1 = arith.constant 0 : index
    %c0_2 = arith.constant 0 : index
    %1 = vector.load %arg3[%c0_1, %c0_2] : memref<1x128xf32, #tpu.memory_space<vmem>>, vector<1x128xf32>
    %c0_3 = arith.constant 0 : index
    %c0_4 = arith.constant 0 : index
    %2 = vector.load %arg5[%c0_3, %c0_4] : memref<1x128xf32, #tpu.memory_space<vmem>>, vector<1x128xf32>
    %c0_5 = arith.constant 0 : index
    %c0_6 = arith.constant 0 : index
    %3 = vector.load %arg7[%c0_5, %c0_6] : memref<1x128xf32, #tpu.memory_space<vmem>>, vector<1x128xf32>
    %c0_7 = arith.constant 0 : index
    %c0_8 = arith.constant 0 : index
    %4 = vector.load %arg2[%c0_7, %c0_8] : memref<16x128xbf16, #tpu.memory_space<vmem>>, vector<16x128xbf16>
    %cst = arith.constant dense<0.000000e+00> : vector<8x128xf32>
    %5 = tpu.matmul %0, %4, %cst {dimension_numbers = #tpu.dot_dimension_numbers<[1], [0], [0], [1], [0, 0, 1, 1], [], []>} : vector<8x16xbf16>, vector<16x128xbf16>, vector<8x128xf32> -> vector<8x128xf32>
    %6 = vector.broadcast %1 : vector<1x128xf32> to vector<8x128xf32>
    %7 = arith.addf %5, %6 : vector<8x128xf32>
    %cst_9 = arith.constant 0.000000e+00 : f32
    %8 = vector.broadcast %cst_9 : f32 to vector<8x128xf32>
    %9 = arith.maximumf %7, %8 : vector<8x128xf32>
    %10 = arith.truncf %9 : vector<8x128xf32> to vector<8x128xbf16>
    %c0_10 = arith.constant 0 : index
    %c0_11 = arith.constant 0 : index
    %11 = vector.load %arg4[%c0_10, %c0_11] : memref<128x128xbf16, #tpu.memory_space<vmem>>, vector<128x128xbf16>
    %cst_12 = arith.constant dense<0.000000e+00> : vector<8x128xf32>
    %12 = tpu.matmul %10, %11, %cst_12 {dimension_numbers = #tpu.dot_dimension_numbers<[1], [0], [0], [1], [0, 0, 1, 1], [], []>} : vector<8x128xbf16>, vector<128x128xbf16>, vector<8x128xf32> -> vector<8x128xf32>
    %13 = vector.broadcast %2 : vector<1x128xf32> to vector<8x128xf32>
    %14 = arith.addf %12, %13 : vector<8x128xf32>
    %cst_13 = arith.constant 0.000000e+00 : f32
    %15 = vector.broadcast %cst_13 : f32 to vector<8x128xf32>
    %16 = arith.maximumf %14, %15 : vector<8x128xf32>
    %17 = arith.truncf %16 : vector<8x128xf32> to vector<8x128xbf16>
    %c0_14 = arith.constant 0 : index
    %c0_15 = arith.constant 0 : index
    %18 = vector.load %arg6[%c0_14, %c0_15] : memref<128x128xbf16, #tpu.memory_space<vmem>>, vector<128x128xbf16>
    %cst_16 = arith.constant dense<0.000000e+00> : vector<8x128xf32>
    %19 = tpu.matmul %17, %18, %cst_16 {dimension_numbers = #tpu.dot_dimension_numbers<[1], [0], [0], [1], [0, 0, 1, 1], [], []>} : vector<8x128xbf16>, vector<128x128xbf16>, vector<8x128xf32> -> vector<8x128xf32>
    %20 = vector.broadcast %3 : vector<1x128xf32> to vector<8x128xf32>
    %21 = arith.addf %19, %20 : vector<8x128xf32>
    %c0_17 = arith.constant 0 : index
    %c0_18 = arith.constant 0 : index
    %22 = vector.load %arg8[%c0_17, %c0_18] : memref<8x128xf32, #tpu.memory_space<vmem>>, vector<8x128xf32>
    tpu.vector_store %arg8[%c0_17, %c0_18], %21 {strides = array<i32>} : memref<8x128xf32, #tpu.memory_space<vmem>>, vector<8x128xf32>,
    return
  }
  func.func @transform_0(%arg0: i32) -> (i32, i32) {
    %c0_i32 = arith.constant 0 : i32
    %c0_i32_0 = arith.constant 0 : i32
    return %arg0, %c0_i32 : i32, i32
  }
  func.func @transform_1(%arg0: i32) -> (i32, i32) {
    %c0_i32 = arith.constant 0 : i32
    %c0_i32_0 = arith.constant 0 : i32
    %c0_i32_1 = arith.constant 0 : i32
    return %c0_i32, %c0_i32_0 : i32, i32
  }
  func.func @transform_2(%arg0: i32) -> (i32, i32) {
    %c0_i32 = arith.constant 0 : i32
    %c0_i32_0 = arith.constant 0 : i32
    %c0_i32_1 = arith.constant 0 : i32
    return %c0_i32, %c0_i32_0 : i32, i32
  }
  func.func @transform_3(%arg0: i32) -> (i32, i32) {
    %c0_i32 = arith.constant 0 : i32
    %c0_i32_0 = arith.constant 0 : i32
    %c0_i32_1 = arith.constant 0 : i32
    return %c0_i32, %c0_i32_0 : i32, i32
  }
  func.func @transform_4(%arg0: i32) -> (i32, i32) {
    %c0_i32 = arith.constant 0 : i32
    %c0_i32_0 = arith.constant 0 : i32
    %c0_i32_1 = arith.constant 0 : i32
    return %c0_i32, %c0_i32_0 : i32, i32
  }
  func.func @transform_5(%arg0: i32) -> (i32, i32) {
    %c0_i32 = arith.constant 0 : i32
    %c0_i32_0 = arith.constant 0 : i32
    %c0_i32_1 = arith.constant 0 : i32
    return %c0_i32, %c0_i32_0 : i32, i32
  }
  func.func @transform_6(%arg0: i32) -> (i32, i32) {
    %c0_i32 = arith.constant 0 : i32
    %c0_i32_0 = arith.constant 0 : i32
    %c0_i32_1 = arith.constant 0 : i32
    return %c0_i32, %c0_i32_0 : i32, i32
  }
  func.func @transform_7(%arg0: i32) -> (i32, i32) {
    %c0_i32 = arith.constant 0 : i32
    %c0_i32_0 = arith.constant 0 : i32
    return %arg0, %c0_i32 : i32, i32
  }
}

</mosaic_0001>

<llo_original>
// kernel: dqn_forward.1
$region0: #{dqn_forward.1}
  #allocation0 [shape = 'u32[]', space=smem, size = 0x4, offset = 0x4, fixed_abs, tag = 'smem constant byte address 0x4 - core index']
  #allocation1 [shape = 'u32[72,128]{1,0:T(1,128)}', space=vmem, size = 0x9000, scoped, tag = 'internal scratch']
  %s0 = inlined_call_operand.vmem [shape: bf16[8,16], index: 0, kind: input, shape index: {}]
  %s1 = inlined_call_operand.vmem [shape: bf16[16,128], index: 1, kind: input, shape index: {}]
  %s2 = inlined_call_operand.vmem [shape: f32[1,128], index: 2, kind: input, shape index: {}]
  %s3 = inlined_call_operand.vmem [shape: bf16[128,128], index: 3, kind: input, shape index: {}]
  %s4 = inlined_call_operand.vmem [shape: f32[1,128], index: 4, kind: input, shape index: {}]
  %s5 = inlined_call_operand.vmem [shape: bf16[128,128], index: 5, kind: input, shape index: {}]
  %s6 = inlined_call_operand.vmem [shape: f32[1,128], index: 6, kind: input, shape index: {}]
  %s7 = inlined_call_operand.vmem [shape: f32[8,128], index: 7, kind: output, shape index: {}]
  %s8 = sld [smem:[#allocation0]]
  $region38: #{dqn_forward.1} parent=0
    _
  %s10 = ssub.s32 1, %s8
  %s11 = scalar_select 0, %s10, %s8
  // Predicated region
  $region2: #{dqn_forward.1} parent=0 // pred_check
    _
  $region3: #{dqn_forward.1} parent=0 // pred_check_branch
    %13 = sbr.rel (0) target = $region5
  $region4: #{dqn_forward.1} parent=0 // pred_region
    _
  $region5: #{dqn_forward.1} parent=0 // pred_fallthru
    _
  // Predicated region
  $region6: #{dqn_forward.1} parent=0 // pred_check
    _
  $region7: #{dqn_forward.1} parent=0 // pred_check_branch
    %15 = sbr.rel (0) target = $region9
  $region8: #{dqn_forward.1} parent=0 // pred_region
    _
  $region9: #{dqn_forward.1} parent=0 // pred_fallthru
    _
  // Predicated region
  $region10: #{dqn_forward.1} parent=0 // pred_check
    _
  $region11: #{dqn_forward.1} parent=0 // pred_check_branch
    %17 = sbr.rel (0) target = $region13
  $region12: #{dqn_forward.1} parent=0 // pred_region
    _
  $region13: #{dqn_forward.1} parent=0 // pred_fallthru
    _
  // Predicated region
  $region14: #{dqn_forward.1} parent=0 // pred_check
    _
  $region15: #{dqn_forward.1} parent=0 // pred_check_branch
    %19 = sbr.rel (0) target = $region17
  $region16: #{dqn_forward.1} parent=0 // pred_region
    _
  $region17: #{dqn_forward.1} parent=0 // pred_fallthru
    _
  // Predicated region
  $region18: #{dqn_forward.1} parent=0 // pred_check
    _
  $region19: #{dqn_forward.1} parent=0 // pred_check_branch
    %21 = sbr.rel (0) target = $region21
  $region20: #{dqn_forward.1} parent=0 // pred_region
    _
  $region21: #{dqn_forward.1} parent=0 // pred_fallthru
    _
  // Predicated region
  $region22: #{dqn_forward.1} parent=0 // pred_check
    _
  $region23: #{dqn_forward.1} parent=0 // pred_check_branch
    %23 = sbr.rel (0) target = $region25
  $region24: #{dqn_forward.1} parent=0 // pred_region
    _
  $region25: #{dqn_forward.1} parent=0 // pred_fallthru
    _
  // Predicated region
  $region26: #{dqn_forward.1} parent=0 // pred_check
    _
  $region27: #{dqn_forward.1} parent=0 // pred_check_branch
    %25 = sbr.rel (0) target = $region29
  $region28: #{dqn_forward.1} parent=0 // pred_region
    _
  $region29: #{dqn_forward.1} parent=0 // pred_fallthru
    _
  %v27 = vld [vmem:[%s0] sm:$0xf]
  %v28 = vld [vmem:[%s2] sm:$0x1]
  %v29 = vld [vmem:[%s4] sm:$0x1]
  %v30 = vld [vmem:[%s6] sm:$0x1]
  %v31 = vld [vmem:[%s1] sm:$0xf]
  %v32 = vld [vmem:[%s1 + $0x4] sm:$0xf]
  %v34 = vperm.slane %v28, 0
  %v38 = vunpack.c.l.b16 %v31
  %v39 = vunpack.c.l.b16 %v32
  %v40 = vpack.c.b16 %v39, %v38
  %vm42 = vcmask 130048
  %v44 = vsel %vm42, %v27, 0
  %46 = vmatpush.bf16.msra.mxu0 0
  %47 = vmatpush.bf16.msra.mxu0 0
  %48 = vmatpush.bf16.msra.mxu0 0
  %49 = vmatpush.bf16.msra.mxu0 0
  %50 = vmatpush.bf16.msra.mxu0 0
  %51 = vmatpush.bf16.msra.mxu0 0
  %52 = vmatpush.bf16.msra.mxu0 0
  %53 = vmatpush.bf16.msra.mxu0 %v40
  %54 = vmatmul.bf16.gmra.mxu0 %v44
  %v55 = vpop.f32.mrf.mxu0
  %v56 = vadd.f32 %v34, %v55
  %v57 = vpop.f32.mrf.mxu0
  %58 = vdwg.mxu0
  %v59 = vmax.f32 %v56, 0.0
  %v60 = vpack.c.bf16 %v59, %v59
  %v61 = vld [vmem:[%s3] sm:$0xf]
  %v62 = vld [vmem:[%s3 + $0x4] sm:$0xf]
  %v63 = vld [vmem:[%s3 + $0x8] sm:$0xf]
  %v64 = vld [vmem:[%s3 + $0xc] sm:$0xf]
  %v65 = vld [vmem:[%s3 + $0x10] sm:$0xf]
  %v66 = vld [vmem:[%s3 + $0x14] sm:$0xf]
  %v67 = vld [vmem:[%s3 + $0x18] sm:$0xf]
  %v68 = vld [vmem:[%s3 + $0x1c] sm:$0xf]
  %v69 = vld [vmem:[%s3 + $0x20] sm:$0xf]
  %v70 = vld [vmem:[%s3 + $0x24] sm:$0xf]
  %v71 = vld [vmem:[%s3 + $0x28] sm:$0xf]
  %v72 = vld [vmem:[%s3 + $0x2c] sm:$0xf]
  %v73 = vld [vmem:[%s3 + $0x30] sm:$0xf]
  %v74 = vld [vmem:[%s3 + $0x34] sm:$0xf]
  %v75 = vld [vmem:[%s3 + $0x38] sm:$0xf]
  %v76 = vld [vmem:[%s3 + $0x3c] sm:$0xf]
  %v78 = vperm.slane %v29, 0
  %v96 = vunpack.c.l.b16 %v61
  %v97 = vunpack.c.l.b16 %v62
  %v98 = vunpack.c.l.b16 %v63
  %v99 = vunpack.c.l.b16 %v64
  %v100 = vunpack.c.l.b16 %v65
  %v101 = vunpack.c.l.b16 %v66
  %v102 = vunpack.c.l.b16 %v67
  %v103 = vunpack.c.l.b16 %v68
  %v104 = vunpack.c.l.b16 %v69
  %v105 = vunpack.c.l.b16 %v70
  %v106 = vunpack.c.l.b16 %v71
  %v107 = vunpack.c.l.b16 %v72
  %v108 = vunpack.c.l.b16 %v73
  %v109 = vunpack.c.l.b16 %v74
  %v110 = vunpack.c.l.b16 %v75
  %v111 = vunpack.c.l.b16 %v76
  %v112 = vpack.c.b16 %v97, %v96
  %v113 = vpack.c.b16 %v99, %v98
  %v114 = vpack.c.b16 %v101, %v100
  %v115 = vpack.c.b16 %v103, %v102
  %v116 = vpack.c.b16 %v105, %v104
  %v117 = vpack.c.b16 %v107, %v106
  %v118 = vpack.c.b16 %v109, %v108
  %v119 = vpack.c.b16 %v111, %v110
  %128 = vmatpush.bf16.msra.mxu0 %v119
  %129 = vmatpush.bf16.msra.mxu0 %v118
  %130 = vmatpush.bf16.msra.mxu0 %v117
  %131 = vmatpush.bf16.msra.mxu0 %v116
  %132 = vmatpush.bf16.msra.mxu0 %v115
  %133 = vmatpush.bf16.msra.mxu0 %v114
  %134 = vmatpush.bf16.msra.mxu0 %v113
  %135 = vmatpush.bf16.msra.mxu0 %v112
  %136 = vmatmul.bf16.gmra.mxu0 %v60
  %v137 = vpop.f32.mrf.mxu0
  %v138 = vadd.f32 %v78, %v137
  %v139 = vpop.f32.mrf.mxu0
  %140 = vdwg.mxu0
  %v141 = vmax.f32 %v138, 0.0
  %v142 = vpack.c.bf16 %v141, %v141
  %v143 = vld [vmem:[%s5] sm:$0xf]
  %v144 = vld [vmem:[%s5 + $0x4] sm:$0xf]
  %v145 = vld [vmem:[%s5 + $0x8] sm:$0xf]
  %v146 = vld [vmem:[%s5 + $0xc] sm:$0xf]
  %v147 = vld [vmem:[%s5 + $0x10] sm:$0xf]
  %v148 = vld [vmem:[%s5 + $0x14] sm:$0xf]
  %v149 = vld [vmem:[%s5 + $0x18] sm:$0xf]
  %v150 = vld [vmem:[%s5 + $0x1c] sm:$0xf]
  %v151 = vld [vmem:[%s5 + $0x20] sm:$0xf]
  %v152 = vld [vmem:[%s5 + $0x24] sm:$0xf]
  %v153 = vld [vmem:[%s5 + $0x28] sm:$0xf]
  %v154 = vld [vmem:[%s5 + $0x2c] sm:$0xf]
  %v155 = vld [vmem:[%s5 + $0x30] sm:$0xf]
  %v156 = vld [vmem:[%s5 + $0x34] sm:$0xf]
  %v157 = vld [vmem:[%s5 + $0x38] sm:$0xf]
  %v158 = vld [vmem:[%s5 + $0x3c] sm:$0xf]
  %v160 = vperm.slane %v30, 0
  %v178 = vunpack.c.l.b16 %v143
  %v179 = vunpack.c.l.b16 %v144
  %v180 = vunpack.c.l.b16 %v145
  %v181 = vunpack.c.l.b16 %v146
  %v182 = vunpack.c.l.b16 %v147
  %v183 = vunpack.c.l.b16 %v148
  %v184 = vunpack.c.l.b16 %v149
  %v185 = vunpack.c.l.b16 %v150
  %v186 = vunpack.c.l.b16 %v151
  %v187 = vunpack.c.l.b16 %v152
  %v188 = vunpack.c.l.b16 %v153
  %v189 = vunpack.c.l.b16 %v154
  %v190 = vunpack.c.l.b16 %v155
  %v191 = vunpack.c.l.b16 %v156
  %v192 = vunpack.c.l.b16 %v157
  %v193 = vunpack.c.l.b16 %v158
  %v194 = vpack.c.b16 %v179, %v178
  %v195 = vpack.c.b16 %v181, %v180
  %v196 = vpack.c.b16 %v183, %v182
  %v197 = vpack.c.b16 %v185, %v184
  %v198 = vpack.c.b16 %v187, %v186
  %v199 = vpack.c.b16 %v189, %v188
  %v200 = vpack.c.b16 %v191, %v190
  %v201 = vpack.c.b16 %v193, %v192
  %210 = vmatpush.bf16.msra.mxu0 %v201
  %211 = vmatpush.bf16.msra.mxu0 %v200
  %212 = vmatpush.bf16.msra.mxu0 %v199
  %213 = vmatpush.bf16.msra.mxu0 %v198
  %214 = vmatpush.bf16.msra.mxu0 %v197
  %215 = vmatpush.bf16.msra.mxu0 %v196
  %216 = vmatpush.bf16.msra.mxu0 %v195
  %217 = vmatpush.bf16.msra.mxu0 %v194
  %218 = vmatmul.bf16.gmra.mxu0 %v142
  %v219 = vpop.f32.mrf.mxu0
  %v220 = vadd.f32 %v160, %v219
  %v221 = vpop.f32.mrf.mxu0
  %222 = vdwg.mxu0
  %223 = vst [vmem:[%s7] sm:$0xff] %v220
  // Predicated region
  $region30: #{dqn_forward.1} parent=0 // pred_check
    _
  $region31: #{dqn_forward.1} parent=0 // pred_check_branch
    %225 = sbr.rel (0) target = $region33
  $region32: #{dqn_forward.1} parent=0 // pred_region
    _
  $region33: #{dqn_forward.1} parent=0 // pred_fallthru
    _
  // Predicated region
  $region34: #{dqn_forward.1} parent=0 // pred_check
    _
  $region35: #{dqn_forward.1} parent=0 // pred_check_branch
    %227 = sbr.rel (0) target = $region37
  $region36: #{dqn_forward.1} parent=0 // pred_region
    _
  $region37: #{dqn_forward.1} parent=0 // pred_fallthru
    _

</llo_original>
